<compile_context>
chip_gen: v5e
topology: v5e:2x2
jax: 0.10.0
libtpu: 0.0.40
codegen_flags: <defaults>
</compile_context>

<pallas_src>
import functools

import jax
import jax.numpy as jnp
from jax import lax
from jax.experimental import pallas as pl
from jax.experimental.pallas import tpu as pltpu

GAMMA = 2.0
ALPHA = 0.25


def _round_up(x, m):
    return ((x + m - 1) // m) * m


def _focal_ce_partial_kernel(logits_ref, targets_ref, out_ref, acc_ref, *,
                             n_valid, tile_n, tiles_per_split):
    s = pl.program_id(0)          # split (parallel axis, one per TensorCore)
    i = pl.program_id(1)          # tile within the split (reduction axis)

    @pl.when(i == 0)
    def _init():
        acc_ref[...] = jnp.zeros_like(acc_ref)

    # (C, TILE_N) slab loaded in its native dtype, upcast after the VMEM load.
    # TODO(synk): on v6e/v7x the subtract/exp slab work could stay in bf16
    # (bf16 VPU/EUP) with f32 row sums; kept f32 for a single codepath (v5e
    # has no bf16 VPU/EUP) and full accuracy.
    x = logits_ref[...].astype(jnp.float32)       # (C, TILE_N)
    tgt = targets_ref[...]                        # (1, TILE_N) int32
    c, tn = x.shape

    # Stable softmax-CE per sample; the per-sample max cancels:
    #   ce = log(sum exp(x - m)) - onehot . (x - m)
    m = jnp.max(x, axis=0, keepdims=True)                        # (1, TILE_N)
    shifted = x - m                                              # (C, TILE_N)
    sum_exp = jnp.sum(jnp.exp(shifted), axis=0, keepdims=True)   # (1, TILE_N)
    cls_ids = lax.broadcasted_iota(jnp.int32, (c, tn), 0)
    tgt_shift = jnp.sum(jnp.where(cls_ids == tgt, shifted, 0.0),
                        axis=0, keepdims=True)                   # (1, TILE_N)
    ce_rows = jnp.log(sum_exp) - tgt_shift                       # (1, TILE_N)

    # Only tiles overlapping the padded tail pay for the row mask.
    tile_start = (s * tiles_per_split + i) * tile_n
    has_padding = tile_start + tile_n > n_valid

    @pl.when(has_padding)
    def _accumulate_masked():
        row_ids = tile_start + lax.broadcasted_iota(jnp.int32, (1, tn), 1)
        acc_ref[...] += jnp.where(row_ids < n_valid, ce_rows, 0.0)

    @pl.when(jnp.logical_not(has_padding))
    def _accumulate():
        acc_ref[...] += ce_rows

    # Flush this split's partial CE sum, broadcast over a lane-dense block.
    @pl.when(i == tiles_per_split - 1)
    def _flush():
        total = jnp.sum(acc_ref[...])
        out_ref[...] = total + jnp.zeros(out_ref.shape, out_ref.dtype)


def focal_loss(logits, targets, *, gamma=GAMMA, alpha=ALPHA, tile_n=None):
    """logits: (N, C) float (f32/bf16) logits, targets: (N,) int class ids -> scalar f32."""
    n, c = logits.shape
    itemsize = jnp.dtype(logits.dtype).itemsize
    lane = 128

    if tile_n is None:
        # ~2 MiB of logits per block (2-4 MiB reaches ~85%+ of the HBM
        # roofline); cap at 64K samples, floor at one lane group.
        tile_n = (2 * 1024 * 1024) // max(c * itemsize, 1)
        tile_n = min(tile_n, 65536)
    tile_n = max(lane, (tile_n // lane) * lane)
    n_lane = _round_up(n, lane)
    tile_n = min(tile_n, n_lane)

    num_tiles = -(-n_lane // tile_n)
    n_split = 2 if num_tiles >= 2 else 1       # v7x: one split per TensorCore
    num_tiles = _round_up(num_tiles, n_split)
    tiles_per_split = num_tiles // n_split
    n_pad = num_tiles * tile_n

    if n_pad != n:
        logits = jnp.pad(logits, ((0, n_pad - n), (0, 0)))
        targets = jnp.pad(targets, ((0, n_pad - n),))

    # Lane-dense layout: samples on the 128-lane axis.  Layout plumbing done
    # once in the wrapper; also avoids DMAing the lane-padded (N, C) layout.
    logits_t = jnp.transpose(logits)                       # (C, N_pad), native dtype
    targets_row = targets.astype(jnp.int32).reshape(1, n_pad)

    kernel = functools.partial(_focal_ce_partial_kernel, n_valid=n,
                               tile_n=tile_n, tiles_per_split=tiles_per_split)

    cost = pl.CostEstimate(
        flops=int(8 * n_pad * c),
        transcendentals=int(n_pad * c + n_pad),
        bytes_accessed=int(n_pad * c * itemsize + n_pad * 4 + n_split * 128 * 4),
    )

    partial_sums = pl.pallas_call(
        kernel,
        out_shape=jax.ShapeDtypeStruct((1, n_split * 128), jnp.float32),
        grid_spec=pltpu.PrefetchScalarGridSpec(
            num_scalar_prefetch=0,
            grid=(n_split, tiles_per_split),
            in_specs=[
                pl.BlockSpec((c, tile_n),
                             lambda s, i: (0, s * tiles_per_split + i)),
                pl.BlockSpec((1, tile_n),
                             lambda s, i: (0, s * tiles_per_split + i)),
            ],
            out_specs=pl.BlockSpec((1, 128), lambda s, i: (0, s)),
            scratch_shapes=[pltpu.VMEM((1, tile_n), jnp.float32)],
        ),
        compiler_params=pltpu.CompilerParams(
            dimension_semantics=("parallel", "arbitrary"),
            vmem_limit_bytes=32 * 1024 * 1024,
        ),
        cost_estimate=cost,
    )(logits_t, targets_row)

    # Combine per-split partial CE sums and apply the focal transform (a few
    # scalar ops; done here so the v7x 2-core split needs no extra finalize).
    partial = partial_sums.reshape(n_split, 128)[:, 0]
    ce = jnp.sum(partial) / jnp.float32(n)
    pt = jnp.exp(-ce)
    one_minus_pt = 1.0 - pt
    if gamma == 2.0:
        mod = one_minus_pt * one_minus_pt
    else:
        mod = jnp.power(jnp.maximum(one_minus_pt, 0.0), jnp.float32(gamma))
    return jnp.float32(alpha) * mod * ce


def _focal_loss_ref(logits, targets, gamma=GAMMA, alpha=ALPHA):
    logits = logits.astype(jnp.float32)
    n = logits.shape[0]
    lse = jax.scipy.special.logsumexp(logits, axis=-1)
    ce = jnp.mean(lse - logits[jnp.arange(n), targets])
    pt = jnp.exp(-ce)
    return alpha * (1.0 - pt) ** gamma * ce


if __name__ == "__main__":
    key = jax.random.PRNGKey(0)
    k1, k2, k3, k4, k5, k6 = jax.random.split(key, 6)

    # Small case consistent with the module: batch of 8 samples, 16 classes.
    N, C = 8, 16
    logits = jax.random.normal(k1, (N, C), dtype=jnp.float32)
    targets = jax.random.randint(k2, (N,), 0, C, dtype=jnp.int32)
    loss = focal_loss(logits, targets)
    jax.block_until_ready(loss)
    ref = _focal_loss_ref(logits, targets)
    assert jnp.allclose(loss, ref, rtol=1e-4, atol=1e-6), (loss, ref)

    # Multi-tile + 2-way split, with a padded tile that is NOT the last tile
    # of its split (exercises the accumulator, the per-split flush, and the
    # scalar-gated padding mask).
    N2, C2 = 300, 16
    logits2 = jax.random.normal(k3, (N2, C2), dtype=jnp.float32)
    targets2 = jax.random.randint(k4, (N2,), 0, C2, dtype=jnp.int32)
    loss2 = focal_loss(logits2, targets2, tile_n=128)
    jax.block_until_ready(loss2)
    ref2 = _focal_loss_ref(logits2, targets2)
    assert jnp.allclose(loss2, ref2, rtol=1e-4, atol=1e-6), (loss2, ref2)

    # Larger batch on the default (big-block) tiling.
    N3, C3 = 2500, 16
    logits3 = jax.random.normal(k5, (N3, C3), dtype=jnp.float32)
    targets3 = jax.random.randint(k6, (N3,), 0, C3, dtype=jnp.int32)
    loss3 = focal_loss(logits3, targets3)
    jax.block_until_ready(loss3)
    ref3 = _focal_loss_ref(logits3, targets3)
    assert jnp.allclose(loss3, ref3, rtol=1e-4, atol=1e-6), (loss3, ref3)

    print("KERNEL_OK")
</pallas_src>

<mosaic_0001>
module attributes {stable_mosaic.version = 11 : i64} {
  func.func @_focal_ce_partial_kernel(%arg0: i32, %arg1: i32, %arg2: memref<16x128xf32, #tpu.memory_space<vmem>>, %arg3: memref<1x128xi32, #tpu.memory_space<vmem>>, %arg4: memref<1x128xf32, #tpu.memory_space<vmem>>, %arg5: memref<1x128xf32, #tpu.memory_space<vmem>>) attributes {dimension_semantics = [#tpu.dimension_semantics<parallel>, #tpu.dimension_semantics<arbitrary>], iteration_bounds = array<i64: 1, 1>, scalar_prefetch = 0 : i64, scratch_operands = 1 : i64, tpu.core_type = #tpu.core_type<tc>, window_params = [{transform_indices = @transform_0, window_bounds = array<i64: 16, 128>}, {transform_indices = @transform_1, window_bounds = array<i64: 1, 128>}, {transform_indices = @transform_2, window_bounds = array<i64: 1, 128>}]} {
    %c0_i32 = arith.constant 0 : i32
    %0 = arith.cmpi eq, %arg1, %c0_i32 : i32
    %1 = arith.extui %0 : i1 to i32
    %c0_i32_0 = arith.constant 0 : i32
    %2 = arith.cmpi ne, %1, %c0_i32_0 : i32
    scf.if %2 {
      %cst_12 = arith.constant 0.000000e+00 : f32
      %34 = vector.broadcast %cst_12 : f32 to vector<1x128xf32>
      %c0_13 = arith.constant 0 : index
      %c0_14 = arith.constant 0 : index
      %35 = vector.load %arg5[%c0_13, %c0_14] : memref<1x128xf32, #tpu.memory_space<vmem>>, vector<1x128xf32>
      tpu.vector_store %arg5[%c0_13, %c0_14], %34 {strides = array<i32>} : memref<1x128xf32, #tpu.memory_space<vmem>>, vector<1x128xf32>,
    } else {
    }
    %c0 = arith.constant 0 : index
    %c0_1 = arith.constant 0 : index
    %3 = vector.load %arg2[%c0, %c0_1] : memref<16x128xf32, #tpu.memory_space<vmem>>, vector<16x128xf32>
    %c0_2 = arith.constant 0 : index
    %c0_3 = arith.constant 0 : index
    %4 = vector.load %arg3[%c0_2, %c0_3] : memref<1x128xi32, #tpu.memory_space<vmem>>, vector<1x128xi32>
    %cst = arith.constant dense<0xFF800000> : vector<128xf32>
    %5 = vector.multi_reduction <maximumf>, %3, %cst [0] : vector<16x128xf32> to vector<128xf32>
    %6 = vector.shape_cast %5 : vector<128xf32> to vector<1x128xf32>
    %7 = vector.broadcast %6 : vector<1x128xf32> to vector<16x128xf32>
    %8 = arith.subf %3, %7 : vector<16x128xf32>
    %9 = math.exp %8 : vector<16x128xf32>
    %cst_4 = arith.constant dense<0.000000e+00> : vector<128xf32>
    %10 = vector.multi_reduction <add>, %9, %cst_4 [0] : vector<16x128xf32> to vector<128xf32>
    %11 = vector.shape_cast %10 : vector<128xf32> to vector<1x128xf32>
    %12 = tpu.iota {dimensions = array<i32: 0>} : vector<16x128xi32>
    %13 = vector.broadcast %4 : vector<1x128xi32> to vector<16x128xi32>
    %14 = arith.cmpi eq, %12, %13 : vector<16x128xi32>
    %cst_5 = arith.constant 0.000000e+00 : f32
    %15 = vector.broadcast %cst_5 : f32 to vector<16x128xf32>
    %16 = arith.select %14, %8, %15 : vector<16x128xi1>, vector<16x128xf32>
    %cst_6 = arith.constant dense<0.000000e+00> : vector<128xf32>
    %17 = vector.multi_reduction <add>, %16, %cst_6 [0] : vector<16x128xf32> to vector<128xf32>
    %18 = vector.shape_cast %17 : vector<128xf32> to vector<1x128xf32>
    %19 = math.log %11 : vector<1x128xf32>
    %20 = arith.subf %19, %18 : vector<1x128xf32>
    %c1_i32 = arith.constant 1 : i32
    %21 = arith.muli %arg0, %c1_i32 : i32
    %22 = arith.addi %21, %arg1 : i32
    %c128_i32 = arith.constant 128 : i32
    %23 = arith.muli %22, %c128_i32 : i32
    %c128_i32_7 = arith.constant 128 : i32
    %24 = arith.addi %23, %c128_i32_7 : i32
    %c8_i32 = arith.constant 8 : i32
    %25 = arith.cmpi sgt, %24, %c8_i32 : i32
    %26 = arith.extui %25 : i1 to i32
    %c0_i32_8 = arith.constant 0 : i32
    %27 = arith.cmpi ne, %26, %c0_i32_8 : i32
    scf.if %27 {
      %34 = tpu.iota {dimensions = array<i32: 1>} : vector<1x128xi32>
      %35 = vector.broadcast %23 : i32 to vector<1x128xi32>
      %36 = arith.addi %35, %34 : vector<1x128xi32>
      %c0_12 = arith.constant 0 : index
      %c0_13 = arith.constant 0 : index
      %37 = vector.load %arg5[%c0_12, %c0_13] : memref<1x128xf32, #tpu.memory_space<vmem>>, vector<1x128xf32>
      %c8_i32_14 = arith.constant 8 : i32
      %38 = vector.broadcast %c8_i32_14 : i32 to vector<1x128xi32>
      %39 = arith.cmpi slt, %36, %38 : vector<1x128xi32>
      %cst_15 = arith.constant 0.000000e+00 : f32
      %40 = vector.broadcast %cst_15 : f32 to vector<1x128xf32>
      %41 = arith.select %39, %20, %40 : vector<1x128xi1>, vector<1x128xf32>
      %42 = arith.addf %37, %41 : vector<1x128xf32>
      %c0_16 = arith.constant 0 : index
      %c0_17 = arith.constant 0 : index
      %43 = vector.load %arg5[%c0_16, %c0_17] : memref<1x128xf32, #tpu.memory_space<vmem>>, vector<1x128xf32>
      tpu.vector_store %arg5[%c0_16, %c0_17], %42 {strides = array<i32>} : memref<1x128xf32, #tpu.memory_space<vmem>>, vector<1x128xf32>,
    } else {
    }
    %true = arith.constant true
    %28 = arith.xori %25, %true : i1
    %29 = arith.extui %28 : i1 to i32
    %c0_i32_9 = arith.constant 0 : i32
    %30 = arith.cmpi ne, %29, %c0_i32_9 : i32
    scf.if %30 {
      %c0_12 = arith.constant 0 : index
      %c0_13 = arith.constant 0 : index
      %34 = vector.load %arg5[%c0_12, %c0_13] : memref<1x128xf32, #tpu.memory_space<vmem>>, vector<1x128xf32>
      %35 = arith.addf %34, %20 : vector<1x128xf32>
      %c0_14 = arith.constant 0 : index
      %c0_15 = arith.constant 0 : index
      %36 = vector.load %arg5[%c0_14, %c0_15] : memref<1x128xf32, #tpu.memory_space<vmem>>, vector<1x128xf32>
      tpu.vector_store %arg5[%c0_14, %c0_15], %35 {strides = array<i32>} : memref<1x128xf32, #tpu.memory_space<vmem>>, vector<1x128xf32>,
    } else {
    }
    %c0_i32_10 = arith.constant 0 : i32
    %31 = arith.cmpi eq, %arg1, %c0_i32_10 : i32
    %32 = arith.extui %31 : i1 to i32
    %c0_i32_11 = arith.constant 0 : i32
    %33 = arith.cmpi ne, %32, %c0_i32_11 : i32
    scf.if %33 {
      %c0_12 = arith.constant 0 : index
      %c0_13 = arith.constant 0 : index
      %34 = vector.load %arg5[%c0_12, %c0_13] : memref<1x128xf32, #tpu.memory_space<vmem>>, vector<1x128xf32>
      %35 = vector.shape_cast %34 : vector<1x128xf32> to vector<1x1x128xf32>
      %cst_14 = arith.constant dense<0.000000e+00> : vector<1xf32>
      %36 = vector.multi_reduction <add>, %35, %cst_14 [1, 2] : vector<1x1x128xf32> to vector<1xf32>
      %37 = vector.shape_cast %36 : vector<1xf32> to vector<1x1x1xf32>
      %38 = vector.extract %37[0, 0, 0] : f32 from vector<1x1x1xf32>
      %cst_15 = arith.constant 0.000000e+00 : f32
      %39 = vector.broadcast %cst_15 : f32 to vector<1x128xf32>
      %40 = vector.broadcast %38 : f32 to vector<1x128xf32>
      %41 = arith.addf %40, %39 : vector<1x128xf32>
      %c0_16 = arith.constant 0 : index
      %c0_17 = arith.constant 0 : index
      %42 = vector.load %arg4[%c0_16, %c0_17] : memref<1x128xf32, #tpu.memory_space<vmem>>, vector<1x128xf32>
      tpu.vector_store %arg4[%c0_16, %c0_17], %41 {strides = array<i32>} : memref<1x128xf32, #tpu.memory_space<vmem>>, vector<1x128xf32>,
    } else {
    }
    return
  }
  func.func @transform_0(%arg0: i32, %arg1: i32) -> (i32, i32) {
    %c1_i32 = arith.constant 1 : i32
    %0 = arith.muli %arg0, %c1_i32 : i32
    %1 = arith.addi %0, %arg1 : i32
    %c0_i32 = arith.constant 0 : i32
    %c0_i32_0 = arith.constant 0 : i32
    return %c0_i32, %1 : i32, i32
  }
  func.func @transform_1(%arg0: i32, %arg1: i32) -> (i32, i32) {
    %c1_i32 = arith.constant 1 : i32
    %0 = arith.muli %arg0, %c1_i32 : i32
    %1 = arith.addi %0, %arg1 : i32
    %c0_i32 = arith.constant 0 : i32
    %c0_i32_0 = arith.constant 0 : i32
    return %c0_i32, %1 : i32, i32
  }
  func.func @transform_2(%arg0: i32, %arg1: i32) -> (i32, i32) {
    %c0_i32 = arith.constant 0 : i32
    %c0_i32_0 = arith.constant 0 : i32
    return %c0_i32, %arg0 : i32, i32
  }
}

</mosaic_0001>

<llo_original>
// kernel: tpu_custom_call.1
$region0: #{tpu_custom_call.1}
  #allocation0 [shape = 'u32[]', space=smem, size = 0x4, offset = 0x4, fixed_abs, tag = 'smem constant byte address 0x4 - core index']
  #allocation1 [shape = 'u32[72,128]{1,0:T(1,128)}', space=vmem, size = 0x9000, scoped, tag = 'internal scratch']
  #allocation2 [shape = 'f32[1,128]{1,0:T(1,128)}', space=vmem, size = 0x200, scoped, tag = 'scratch operand']
  %s0 = inlined_call_operand.hbm [shape: f32[16,128], index: 0, kind: input, shape index: {}]
  %s1 = inlined_call_operand.hbm [shape: s32[1,128], index: 1, kind: input, shape index: {}]
  %s2 = inlined_call_operand.hbm [shape: f32[1,128], index: 2, kind: output, shape index: {}]
  %s3 = sld [smem:[#allocation0]]
  $region42: #{tpu_custom_call.1} parent=0
    _
  %s5 = ssub.s32 1, %s3
  %s6 = scalar_select 0, %s5, %s3
  $region1: #{tpu_custom_call.1} parent=0
    #allocation3 [shape = 'u8[8192]{0}', space=vmem, size = 0x2000, scoped, tag = 'input window, operand 0, single buffered']
    #allocation4 [shape = 's32[1]{0}', space=sflag, size = 0x4, scoped, tag = 'scoped memory for tpu_custom_call.1']
    #allocation5 [shape = 's32[1]{0}', space=sflag, size = 0x4, scoped, tag = 'scoped memory for tpu_custom_call.1']
    #allocation6 [shape = 'u8[512]{0}', space=vmem, size = 0x400, scoped, tag = 'input window, operand 1, single buffered']
    #allocation7 [shape = 's32[1]{0}', space=sflag, size = 0x4, scoped, tag = 'scoped memory for tpu_custom_call.1']
    #allocation8 [shape = 'u8[512]{0}', space=vmem, size = 0x400, scoped, tag = 'output window, operand 0, single buffered']
    %7 = vsyncpa [#allocation4], 0
    %8 = vsyncpa [#allocation7], 0
    %9 = vsyncpa [#allocation5], 0
    // Predicated region
    $region2: #{tpu_custom_call.1} parent=1 // pred_check
      _
    $region3: #{tpu_custom_call.1} parent=1 // pred_check_branch
      %11 = sbr.rel (0) target = $region5
    $region4: #{tpu_custom_call.1} parent=1 // pred_region
      %s12 = sadd.s32 0, 0
      %14 = vsyncadd [#allocation4], 0
      %s15 = smul.addr %s12, 8
      %s16 = scalar_lea.hbm %s0, %s15
      %s17 = sshll.u32 %s16, 4
      %s18 = int_to_ptr.hbm [resolvable:$true] %s17
      %s19 = sshll.u32 [#allocation3], 4
      %s20 = int_to_ptr.vmem [resolvable:$true] %s19
      %25 = dma.hbm_to_vmem [thread:$0]  %s18, 256, %s20, [#allocation4], 128, 128, 8
    $region5: #{tpu_custom_call.1} parent=1 // pred_fallthru
      _
    // Predicated region
    $region6: #{tpu_custom_call.1} parent=1 // pred_check
      _
    $region7: #{tpu_custom_call.1} parent=1 // pred_check_branch
      %27 = sbr.rel (0) target = $region9
    $region8: #{tpu_custom_call.1} parent=1 // pred_region
      %s28 = sadd.s32 0, 0
      %30 = vsyncadd [#allocation7], 0
      %s31 = scalar_lea.hbm %s1, %s28
      %s33 = sshll.u32 %s31, 4
      %s34 = int_to_ptr.hbm [resolvable:$true] %s33
      %s35 = sshll.u32 [#allocation6], 4
      %s36 = int_to_ptr.vmem [resolvable:$true] %s35
      %38 = dma.hbm_to_vmem [thread:$0]  %s34, 16, %s36, [#allocation7]
    $region9: #{tpu_custom_call.1} parent=1 // pred_fallthru
      _
    // Predicated region
    $region10: #{tpu_custom_call.1} parent=1 // pred_check
      _
    $region11: #{tpu_custom_call.1} parent=1 // pred_check_branch
      %40 = sbr.rel (0) target = $region13
    $region12: #{tpu_custom_call.1} parent=1 // pred_region
      %42 = dma.done [#allocation4], 256
    $region13: #{tpu_custom_call.1} parent=1 // pred_fallthru
      _
    // Predicated region
    $region14: #{tpu_custom_call.1} parent=1 // pred_check
      _
    $region15: #{tpu_custom_call.1} parent=1 // pred_check_branch
      %44 = sbr.rel (0) target = $region17
    $region16: #{tpu_custom_call.1} parent=1 // pred_region
      %46 = dma.done [#allocation7], 16
    $region17: #{tpu_custom_call.1} parent=1 // pred_fallthru
      _
    %s47 = sadd.s32 0, 0
    %s48 = sadd.s32 0, 0
    %p49 = scmp.eq.s32.totalorder 0, 0
    // Predicated region
    $region18: #{tpu_custom_call.1} parent=1 // pred_check
      %p50 = pneg %p49
    $region19: #{tpu_custom_call.1} parent=1 // pred_check_branch
      %52 = sbr.rel (%p50) target = $region21
    $region20: #{tpu_custom_call.1} parent=1 // pred_region
      %53 = vst [vmem:[#allocation2] sm:$0x1] 0.0
    $region21: #{tpu_custom_call.1} parent=1 // pred_fallthru
      _
    %v54 = vld [vmem:[#allocation3] sm:$0xff]
    %v55 = vld [vmem:[#allocation3 + $0x8] sm:$0xff]
    %v56 = vld [vmem:[#allocation6] sm:$0x1]
    %v57 = vmax.f32 %v54, %v55
    %v58 = vrot.slane %v57, 4
    %v59 = vmax.f32 %v57, %v58
    %v60 = vrot.slane %v59, 2
    %v61 = vmax.f32 %v59, %v60
    %v62 = vrot.slane %v61, 1
    %v63 = vmax.f32 %v61, %v62
    %v64 = vsub.f32 %v54, %v63
    %v65 = vsub.f32 %v55, %v63
    %v66 = vmul.f32 %v64, 1.442695
    %v67 = vpow.pop %v66
    %v68 = vmul.f32 %v65, 1.442695
    %v69 = vpow.pop %v68
    %v70 = vadd.f32 %v67, %v69
    %v71 = vrot.slane %v70, 4
    %v72 = vadd.f32 %v70, %v71
    %v73 = vrot.slane %v72, 2
    %v74 = vadd.f32 %v72, %v73
    %v75 = vrot.slane %v74, 1
    %v76 = vadd.f32 %v74, %v75
    %v77 = vlaneseq
    %v78 = vshrl.u32 %v77, 7
    %v79 = vadd.s32 %v78, 8
    %v80 = vperm.slane %v56, 0
    %vm81 = vcmp.eq.s32.totalorder %v78, %v80
    %vm82 = vcmp.eq.s32.totalorder %v79, %v80
    %v83 = vsel %vm81, %v64, 0.0
    %v84 = vsel %vm82, %v65, 0.0
    %v85 = vadd.f32 %v83, %v84
    %v86 = vrot.slane %v85, 4
    %v87 = vadd.f32 %v85, %v86
    %v88 = vrot.slane %v87, 2
    %v89 = vadd.f32 %v87, %v88
    %v90 = vrot.slane %v89, 1
    %v91 = vadd.f32 %v89, %v90
    %v92 = vlog2.pop %v76
    %v93 = vmul.f32 %v92, 0.6931472
    %v94 = vsub.f32 %v93, %v91
    %s95 = sadd.s32 0, 0
    %s96 = smul.u32 %s95, 128
    %s97 = sadd.s32 %s96, 128
    %p98 = scmp.gt.s32.totalorder %s97, 8
    // Predicated region
    $region22: #{tpu_custom_call.1} parent=1 // pred_check
      %p99 = pneg %p98
    $region23: #{tpu_custom_call.1} parent=1 // pred_check_branch
      %101 = sbr.rel (%p99) target = $region25
    $region24: #{tpu_custom_call.1} parent=1 // pred_region
      %v102 = vlaneseq
      %v103 = vand.u32 %v102, 127
      %v104 = vstv %s96
      %v105 = vadd.s32 %v104, %v103
      %v106 = vld [vmem:[#allocation2] sm:$0x1]
      %vm107 = vcmp.lt.s32.totalorder %v105, 8
      %v108 = vsel %vm107, %v94, 0.0
      %v109 = vadd.f32 %v106, %v108
      %110 = vst [vmem:[#allocation2] sm:$0x1] %v109
    $region25: #{tpu_custom_call.1} parent=1 // pred_fallthru
      _
    %p111 = scmp.le.s32.totalorder %s97, 8
    // Predicated region
    $region26: #{tpu_custom_call.1} parent=1 // pred_check
      %p112 = pneg %p111
    $region27: #{tpu_custom_call.1} parent=1 // pred_check_branch
      %114 = sbr.rel (%p112) target = $region29
    $region28: #{tpu_custom_call.1} parent=1 // pred_region
      %v115 = vld [vmem:[#allocation2] sm:$0x1]
      %v116 = vadd.f32 %v115, %v94
      %117 = vst [vmem:[#allocation2] sm:$0x1] %v116
    $region29: #{tpu_custom_call.1} parent=1 // pred_fallthru
      _
    // Predicated region
    $region30: #{tpu_custom_call.1} parent=1 // pred_check
      %p118 = pneg %p49
    $region31: #{tpu_custom_call.1} parent=1 // pred_check_branch
      %120 = sbr.rel (%p118) target = $region33
    $region32: #{tpu_custom_call.1} parent=1 // pred_region
      %v121 = vld [vmem:[#allocation2] sm:$0x1]
      %vm122 = vcmask 1040384
      %v123 = vsel %vm122, %v121, 0.0
      %124 = vadd.xlane.f32.xlu0 %v123
      %v125 = vpop.xlane.xlu0 %124
      %v126 = vrot.slane %v125, 4
      %v127 = vadd.f32 %v125, %v126
      %v128 = vrot.slane %v127, 2
      %v129 = vadd.f32 %v127, %v128
      %v130 = vrot.slane %v129, 1
      %v131 = vadd.f32 %v129, %v130
      %s132 = vtos %v131
      %v133 = vstv %s132
      %v134 = vadd.f32 %v133, 0.0
      %135 = vst [vmem:[#allocation8] sm:$0x1] %v134
    $region33: #{tpu_custom_call.1} parent=1 // pred_fallthru
      _
    // Predicated region
    $region34: #{tpu_custom_call.1} parent=1 // pred_check
      _
    $region35: #{tpu_custom_call.1} parent=1 // pred_check_branch
      %137 = sbr.rel (0) target = $region37
    $region36: #{tpu_custom_call.1} parent=1 // pred_region
      %139 = vsyncadd [#allocation5], 0
      %s141 = sshll.u32 [#allocation8], 4
      %s142 = int_to_ptr.vmem [resolvable:$true] %s141
      %s143 = sshll.u32 %s2, 4
      %s144 = int_to_ptr.hbm [resolvable:$true] %s143
      %146 = dma.vmem_to_hbm [thread:$0]  %s142, 16, %s144, [#allocation5]
    $region37: #{tpu_custom_call.1} parent=1 // pred_fallthru
      _
    // Predicated region
    $region38: #{tpu_custom_call.1} parent=1 // pred_check
      _
    $region39: #{tpu_custom_call.1} parent=1 // pred_check_branch
      %148 = sbr.rel (0) target = $region41
    $region40: #{tpu_custom_call.1} parent=1 // pred_region
      %150 = dma.done [#allocation5], 16
    $region41: #{tpu_custom_call.1} parent=1 // pred_fallthru
      _
    %151 = vsyncpa [#allocation4], 1
    %152 = vsyncpa [#allocation7], 1
    %153 = vsyncpa [#allocation5], 1

</llo_original>
